<compile_context>
chip_gen: v5e
topology: v5e:2x2
jax: 0.10.0
libtpu: 0.0.40
codegen_flags: <defaults>
</compile_context>

<pallas_src>
import jax
import jax.numpy as jnp
from jax import lax
from jax.experimental import pallas as pl
from jax.experimental.pallas import tpu as pltpu

STATE_DIM = 16      # config.STATE_DIM (small synthetic choice)
HIDDEN_UNITS = 32   # config.HIDDEN_UNITS (small synthetic choice)
BATCH = 40          # demo batch


def _round_up(x, m):
    return ((x + m - 1) // m) * m


def critic_kernel(x_ref, w1_ref, b1_ref, w2_ref, b2_ref, w3_ref, b3_ref, o_ref):
    """One batch tile of the 3-layer MLP, batch on the lane axis.

    x_ref : (TB, state_dim)         state tile (as laid out in HBM)
    w1    : (H, state_dim), b1: (H, 1)     -- PyTorch (out, in) layout
    w2    : (H, H),         b2: (H, 1)
    w3    : (1, H),         b3: (1, 1)
    o_ref : (1, TB)                  lane-dense value row
    """
    x = x_ref[...]                                   # (TB, S)

    # h1[h, b] = sum_s w1[h, s] * x[b, s]  -> (H, TB); batch stays on lanes.
    h1 = lax.dot_general(
        w1_ref[...], x,
        dimension_numbers=(((1,), (1,)), ((), ())),
        preferred_element_type=jnp.float32)
    h1 = jnp.tanh(h1 + b1_ref[...])                  # (H, 1) broadcasts over lanes

    h2 = jnp.dot(w2_ref[...], h1, preferred_element_type=jnp.float32)
    h2 = jnp.tanh(h2 + b2_ref[...])                  # (H, TB)

    v = jnp.dot(w3_ref[...], h2, preferred_element_type=jnp.float32) + b3_ref[...]
    o_ref[...] = v.astype(o_ref.dtype)               # (1, TB) lane-dense store


def critic_forward(state, params, *, block_b=1024):
    """Value-function forward pass. state: (B, state_dim) f32 -> (B, 1) f32."""
    w1, b1, w2, b2, w3, b3 = params
    B, state_dim = state.shape
    hidden = w1.shape[0]

    if B <= 128:
        # Single tile covering the whole batch (block dims == full array dims,
        # so the (8, 128) divisibility constraint is satisfied by equality).
        tb = B
    else:
        # Lane-axis tile: multiple of 128; split into >= 2 steps so both
        # TensorCores on v7x get work, capped at block_b for large batches.
        tb = min(block_b, _round_up(pl.cdiv(B, 2), 128))
    grid = (pl.cdiv(B, tb),)

    out = pl.pallas_call(
        critic_kernel,
        out_shape=jax.ShapeDtypeStruct((1, B), jnp.float32),
        grid=grid,
        in_specs=[
            # State: tiled over the batch grid axis (tail block reads past B are
            # unspecified but rows are independent and OOB writes are masked).
            pl.BlockSpec((tb, state_dim), lambda i: (i, 0)),
            # Weights/biases: constant block index => resident in VMEM.
            pl.BlockSpec((hidden, state_dim), lambda i: (0, 0)),
            pl.BlockSpec((hidden, 1), lambda i: (0, 0)),
            pl.BlockSpec((hidden, hidden), lambda i: (0, 0)),
            pl.BlockSpec((hidden, 1), lambda i: (0, 0)),
            pl.BlockSpec((1, hidden), lambda i: (0, 0)),
            pl.BlockSpec((1, 1), lambda i: (0, 0)),
        ],
        out_specs=pl.BlockSpec((1, tb), lambda i: (0, i)),
        compiler_params=pltpu.CompilerParams(
            # Batch tiles are independent -> shard across TensorCores on v7x.
            dimension_semantics=("parallel",),
        ),
    )(state, w1, b1, w2, b2, w3, b3)

    # (1, B) -> (B, 1): pure reshape (same flat layout), no extra HBM pass.
    return out.reshape(B, 1)


def init_params(key, state_dim=STATE_DIM, hidden=HIDDEN_UNITS):
    """Init mimicking torch.nn.Linear default U[-1/sqrt(fan_in), +1/sqrt(fan_in)].

    Weights in PyTorch (out_features, in_features) layout; biases as
    (out_features, 1) so they broadcast over the lane (batch) axis in-kernel.
    """
    ks = jax.random.split(key, 6)

    def linear(kw, kb, fan_in, fan_out):
        bound = 1.0 / jnp.sqrt(jnp.float32(fan_in))
        w = jax.random.uniform(kw, (fan_out, fan_in), jnp.float32, -bound, bound)
        b = jax.random.uniform(kb, (fan_out, 1), jnp.float32, -bound, bound)
        return w, b

    w1, b1 = linear(ks[0], ks[1], state_dim, hidden)
    w2, b2 = linear(ks[2], ks[3], hidden, hidden)
    w3, b3 = linear(ks[4], ks[5], hidden, 1)
    return (w1, b1, w2, b2, w3, b3)


def critic_reference(state, params):
    w1, b1, w2, b2, w3, b3 = params
    h1 = jnp.tanh(state @ w1.T + b1.T)
    h2 = jnp.tanh(h1 @ w2.T + b2.T)
    return h2 @ w3.T + b3.T


if __name__ == "__main__":
    key = jax.random.PRNGKey(0)
    k_params, k_state, k_state2 = jax.random.split(key, 3)

    params = init_params(k_params)

    # Case 1: small batch -> single full-batch tile (tb == B == 40).
    state = jax.random.normal(k_state, (BATCH, STATE_DIM), jnp.float32)
    out = jax.block_until_ready(critic_forward(state, params))
    ref = critic_reference(state, params)
    assert out.shape == (BATCH, 1), out.shape
    assert jnp.allclose(out, ref, atol=1e-4, rtol=1e-4), (
        f"max abs err = {jnp.max(jnp.abs(out - ref))}"
    )

    # Case 2: B=300 -> tb=256, grid=2 (exercises the masked tail block and the
    # 2-step parallel grid that feeds both TensorCores on v7x).
    state2 = jax.random.normal(k_state2, (300, STATE_DIM), jnp.float32)
    out2 = jax.block_until_ready(critic_forward(state2, params))
    ref2 = critic_reference(state2, params)
    assert out2.shape == (300, 1), out2.shape
    assert jnp.allclose(out2, ref2, atol=1e-4, rtol=1e-4), (
        f"max abs err = {jnp.max(jnp.abs(out2 - ref2))}"
    )

    print("KERNEL_OK")
</pallas_src>

<mosaic_0001>
module attributes {stable_mosaic.version = 11 : i64} {
  func.func @critic_kernel(%arg0: i32, %arg1: memref<40x16xf32, #tpu.memory_space<vmem>>, %arg2: memref<32x16xf32, #tpu.memory_space<vmem>>, %arg3: memref<32x1xf32, #tpu.memory_space<vmem>>, %arg4: memref<32x32xf32, #tpu.memory_space<vmem>>, %arg5: memref<32x1xf32, #tpu.memory_space<vmem>>, %arg6: memref<1x32xf32, #tpu.memory_space<vmem>>, %arg7: memref<1x1xf32, #tpu.memory_space<vmem>>, %arg8: memref<1x40xf32, #tpu.memory_space<vmem>>) attributes {dimension_semantics = [#tpu.dimension_semantics<parallel>], iteration_bounds = array<i64: 1>, scalar_prefetch = 0 : i64, scratch_operands = 0 : i64, tpu.core_type = #tpu.core_type<tc>, window_params = [{transform_indices = @transform_0, window_bounds = array<i64: 40, 16>}, {pipeline_mode = #tpu.pipeline_mode<synchronous>, transform_indices = @transform_1, window_bounds = array<i64: 32, 16>}, {pipeline_mode = #tpu.pipeline_mode<synchronous>, transform_indices = @transform_2, window_bounds = array<i64: 32, 1>}, {pipeline_mode = #tpu.pipeline_mode<synchronous>, transform_indices = @transform_3, window_bounds = array<i64: 32, 32>}, {pipeline_mode = #tpu.pipeline_mode<synchronous>, transform_indices = @transform_4, window_bounds = array<i64: 32, 1>}, {pipeline_mode = #tpu.pipeline_mode<synchronous>, transform_indices = @transform_5, window_bounds = array<i64: 1, 32>}, {pipeline_mode = #tpu.pipeline_mode<synchronous>, transform_indices = @transform_6, window_bounds = array<i64: 1, 1>}, {transform_indices = @transform_7, window_bounds = array<i64: 1, 40>}]} {
    %c0 = arith.constant 0 : index
    %c0_0 = arith.constant 0 : index
    %0 = vector.load %arg1[%c0, %c0_0] : memref<40x16xf32, #tpu.memory_space<vmem>>, vector<40x16xf32>
    %c0_1 = arith.constant 0 : index
    %c0_2 = arith.constant 0 : index
    %1 = vector.load %arg2[%c0_1, %c0_2] : memref<32x16xf32, #tpu.memory_space<vmem>>, vector<32x16xf32>
    %cst = arith.constant dense<0.000000e+00> : vector<32x40xf32>
    %2 = tpu.matmul %1, %0, %cst {dimension_numbers = #tpu.dot_dimension_numbers<[1], [1], [0], [0], [0, 0, 1, 0], [], []>} : vector<32x16xf32>, vector<40x16xf32>, vector<32x40xf32> -> vector<32x40xf32>
    %c0_3 = arith.constant 0 : index
    %c0_4 = arith.constant 0 : index
    %3 = vector.load %arg3[%c0_3, %c0_4] : memref<32x1xf32, #tpu.memory_space<vmem>>, vector<32x1xf32>
    %4 = vector.broadcast %3 : vector<32x1xf32> to vector<32x40xf32>
    %5 = arith.addf %2, %4 : vector<32x40xf32>
    %6 = math.tanh %5 : vector<32x40xf32>
    %c0_5 = arith.constant 0 : index
    %c0_6 = arith.constant 0 : index
    %7 = vector.load %arg4[%c0_5, %c0_6] : memref<32x32xf32, #tpu.memory_space<vmem>>, vector<32x32xf32>
    %cst_7 = arith.constant dense<0.000000e+00> : vector<32x40xf32>
    %8 = tpu.matmul %7, %6, %cst_7 {dimension_numbers = #tpu.dot_dimension_numbers<[1], [0], [0], [1], [0, 0, 1, 1], [], []>} : vector<32x32xf32>, vector<32x40xf32>, vector<32x40xf32> -> vector<32x40xf32>
    %c0_8 = arith.constant 0 : index
    %c0_9 = arith.constant 0 : index
    %9 = vector.load %arg5[%c0_8, %c0_9] : memref<32x1xf32, #tpu.memory_space<vmem>>, vector<32x1xf32>
    %10 = vector.broadcast %9 : vector<32x1xf32> to vector<32x40xf32>
    %11 = arith.addf %8, %10 : vector<32x40xf32>
    %12 = math.tanh %11 : vector<32x40xf32>
    %c0_10 = arith.constant 0 : index
    %c0_11 = arith.constant 0 : index
    %13 = vector.load %arg6[%c0_10, %c0_11] : memref<1x32xf32, #tpu.memory_space<vmem>>, vector<1x32xf32>
    %cst_12 = arith.constant dense<0.000000e+00> : vector<1x40xf32>
    %14 = tpu.matmul %13, %12, %cst_12 {dimension_numbers = #tpu.dot_dimension_numbers<[1], [0], [0], [1], [0, 0, 1, 1], [], []>} : vector<1x32xf32>, vector<32x40xf32>, vector<1x40xf32> -> vector<1x40xf32>
    %c0_13 = arith.constant 0 : index
    %c0_14 = arith.constant 0 : index
    %15 = vector.load %arg7[%c0_13, %c0_14] : memref<1x1xf32, #tpu.memory_space<vmem>>, vector<1x1xf32>
    %16 = vector.broadcast %15 : vector<1x1xf32> to vector<1x40xf32>
    %17 = arith.addf %14, %16 : vector<1x40xf32>
    %c0_15 = arith.constant 0 : index
    %c0_16 = arith.constant 0 : index
    %18 = vector.load %arg8[%c0_15, %c0_16] : memref<1x40xf32, #tpu.memory_space<vmem>>, vector<1x40xf32>
    tpu.vector_store %arg8[%c0_15, %c0_16], %17 {strides = array<i32>} : memref<1x40xf32, #tpu.memory_space<vmem>>, vector<1x40xf32>,
    return
  }
  func.func @transform_0(%arg0: i32) -> (i32, i32) {
    %c0_i32 = arith.constant 0 : i32
    %c0_i32_0 = arith.constant 0 : i32
    return %arg0, %c0_i32 : i32, i32
  }
  func.func @transform_1(%arg0: i32) -> (i32, i32) {
    %c0_i32 = arith.constant 0 : i32
    %c0_i32_0 = arith.constant 0 : i32
    %c0_i32_1 = arith.constant 0 : i32
    return %c0_i32, %c0_i32_0 : i32, i32
  }
  func.func @transform_2(%arg0: i32) -> (i32, i32) {
    %c0_i32 = arith.constant 0 : i32
    %c0_i32_0 = arith.constant 0 : i32
    %c0_i32_1 = arith.constant 0 : i32
    return %c0_i32, %c0_i32_0 : i32, i32
  }
  func.func @transform_3(%arg0: i32) -> (i32, i32) {
    %c0_i32 = arith.constant 0 : i32
    %c0_i32_0 = arith.constant 0 : i32
    %c0_i32_1 = arith.constant 0 : i32
    return %c0_i32, %c0_i32_0 : i32, i32
  }
  func.func @transform_4(%arg0: i32) -> (i32, i32) {
    %c0_i32 = arith.constant 0 : i32
    %c0_i32_0 = arith.constant 0 : i32
    %c0_i32_1 = arith.constant 0 : i32
    return %c0_i32, %c0_i32_0 : i32, i32
  }
  func.func @transform_5(%arg0: i32) -> (i32, i32) {
    %c0_i32 = arith.constant 0 : i32
    %c0_i32_0 = arith.constant 0 : i32
    %c0_i32_1 = arith.constant 0 : i32
    return %c0_i32, %c0_i32_0 : i32, i32
  }
  func.func @transform_6(%arg0: i32) -> (i32, i32) {
    %c0_i32 = arith.constant 0 : i32
    %c0_i32_0 = arith.constant 0 : i32
    %c0_i32_1 = arith.constant 0 : i32
    return %c0_i32, %c0_i32_0 : i32, i32
  }
  func.func @transform_7(%arg0: i32) -> (i32, i32) {
    %c0_i32 = arith.constant 0 : i32
    %c0_i32_0 = arith.constant 0 : i32
    return %c0_i32, %arg0 : i32, i32
  }
}

</mosaic_0001>

<llo_original>
// kernel: tpu_custom_call.1
$region0: #{tpu_custom_call.1}
  #allocation0 [shape = 'u32[]', space=smem, size = 0x4, offset = 0x4, fixed_abs, tag = 'smem constant byte address 0x4 - core index']
  #allocation1 [shape = 'u32[72,128]{1,0:T(1,128)}', space=vmem, size = 0x9000, scoped, tag = 'internal scratch']
  #allocation2 [shape = 'f32[1,1]{1,0:T(1,128)S(1)}', space=vmem, size = 0x200, scoped, tag = 'scoped memory for tpu_custom_call.1']
  %s0 = inlined_call_operand.vmem [shape: f32[40,16], index: 0, kind: input, shape index: {}]
  %s1 = inlined_call_operand.vmem [shape: f32[32,16], index: 1, kind: input, shape index: {}]
  %s2 = inlined_call_operand.vmem [shape: f32[32,1], index: 2, kind: input, shape index: {}]
  %s3 = inlined_call_operand.vmem [shape: f32[32,32], index: 3, kind: input, shape index: {}]
  %s4 = inlined_call_operand.vmem [shape: f32[32,1], index: 4, kind: input, shape index: {}]
  %s5 = inlined_call_operand.vmem [shape: f32[1,32], index: 5, kind: input, shape index: {}]
  %s6 = inlined_call_operand.<no memory space> [shape: f32[1,1], index: 6, kind: input, shape index: {}]
  %s7 = inlined_call_operand.hbm [shape: f32[1,40], index: 7, kind: output, shape index: {}]
  %s8 = sld [smem:[#allocation0]]
  $region38: #{tpu_custom_call.1} parent=0
    _
  %s10 = ssub.s32 1, %s8
  %s11 = scalar_select 0, %s10, %s8
  %v12 = vstv %s6
  %13 = vst [vmem:[#allocation2] sm:$0x1] %v12
  $region1: #{tpu_custom_call.1} parent=0
    #allocation3 [shape = 'u8[512]{0}', space=vmem, size = 0x400, scoped, tag = 'output window, operand 0, single buffered']
    #allocation4 [shape = 's32[1]{0}', space=sflag, size = 0x4, scoped, tag = 'scoped memory for tpu_custom_call.1']
    %14 = vsyncpa [#allocation4], 0
    // Predicated region
    $region2: #{tpu_custom_call.1} parent=1 // pred_check
      _
    $region3: #{tpu_custom_call.1} parent=1 // pred_check_branch
      %16 = sbr.rel (0) target = $region5
    $region4: #{tpu_custom_call.1} parent=1 // pred_region
      _
    $region5: #{tpu_custom_call.1} parent=1 // pred_fallthru
      _
    // Predicated region
    $region6: #{tpu_custom_call.1} parent=1 // pred_check
      _
    $region7: #{tpu_custom_call.1} parent=1 // pred_check_branch
      %18 = sbr.rel (0) target = $region9
    $region8: #{tpu_custom_call.1} parent=1 // pred_region
      _
    $region9: #{tpu_custom_call.1} parent=1 // pred_fallthru
      _
    // Predicated region
    $region10: #{tpu_custom_call.1} parent=1 // pred_check
      _
    $region11: #{tpu_custom_call.1} parent=1 // pred_check_branch
      %20 = sbr.rel (0) target = $region13
    $region12: #{tpu_custom_call.1} parent=1 // pred_region
      _
    $region13: #{tpu_custom_call.1} parent=1 // pred_fallthru
      _
    // Predicated region
    $region14: #{tpu_custom_call.1} parent=1 // pred_check
      _
    $region15: #{tpu_custom_call.1} parent=1 // pred_check_branch
      %22 = sbr.rel (0) target = $region17
    $region16: #{tpu_custom_call.1} parent=1 // pred_region
      _
    $region17: #{tpu_custom_call.1} parent=1 // pred_fallthru
      _
    // Predicated region
    $region18: #{tpu_custom_call.1} parent=1 // pred_check
      _
    $region19: #{tpu_custom_call.1} parent=1 // pred_check_branch
      %24 = sbr.rel (0) target = $region21
    $region20: #{tpu_custom_call.1} parent=1 // pred_region
      _
    $region21: #{tpu_custom_call.1} parent=1 // pred_fallthru
      _
    // Predicated region
    $region22: #{tpu_custom_call.1} parent=1 // pred_check
      _
    $region23: #{tpu_custom_call.1} parent=1 // pred_check_branch
      %26 = sbr.rel (0) target = $region25
    $region24: #{tpu_custom_call.1} parent=1 // pred_region
      _
    $region25: #{tpu_custom_call.1} parent=1 // pred_fallthru
      _
    // Predicated region
    $region26: #{tpu_custom_call.1} parent=1 // pred_check
      _
    $region27: #{tpu_custom_call.1} parent=1 // pred_check_branch
      %28 = sbr.rel (0) target = $region29
    $region28: #{tpu_custom_call.1} parent=1 // pred_region
      _
    $region29: #{tpu_custom_call.1} parent=1 // pred_fallthru
      _
    %v29 = vld [vmem:[%s0] sm:$0xff]
    %v30 = vld [vmem:[%s0 + $0x8] sm:$0xff]
    %v31 = vld [vmem:[%s0 + $0x10] sm:$0xff]
    %v32 = vld [vmem:[%s0 + $0x18] sm:$0xff]
    %v33 = vld [vmem:[%s0 + $0x20] sm:$0xff]
    %v34 = vld [vmem:[%s1] sm:$0xff]
    %v35 = vld [vmem:[%s1 + $0x8] sm:$0xff]
    %v36 = vld [vmem:[%s1 + $0x10] sm:$0xff]
    %v37 = vld [vmem:[%s1 + $0x18] sm:$0xff]
    %v38 = vld [vmem:[%s2] sm:$0xff]
    %v39 = vld [vmem:[%s2 + $0x8] sm:$0xff]
    %v40 = vld [vmem:[%s2 + $0x10] sm:$0xff]
    %v41 = vld [vmem:[%s2 + $0x18] sm:$0xff]
    %43 = vset.pattern.permute.xlu0 0
    %44 = vperm.xlu0 %43, %v38
    %v45 = vpop.permute.xlu0 %44
    %48 = vset.pattern.permute.xlu0 0
    %49 = vperm.xlu0 %48, %v39
    %v50 = vpop.permute.xlu0 %49
    %53 = vset.pattern.permute.xlu0 0
    %54 = vperm.xlu0 %53, %v40
    %v55 = vpop.permute.xlu0 %54
    %58 = vset.pattern.permute.xlu0 0
    %59 = vperm.xlu0 %58, %v41
    %v60 = vpop.permute.xlu0 %59
    %vm62 = vcmask 130048
    %v64 = vsel %vm62, %v34, 0
    %v67 = vsel %vm62, %v35, 0
    %v70 = vsel %vm62, %v36, 0
    %v73 = vsel %vm62, %v37, 0
    %v76 = vsel %vm62, %v29, 0
    %v79 = vsel %vm62, %v30, 0
    %v82 = vsel %vm62, %v31, 0
    %v85 = vsel %vm62, %v32, 0
    %v88 = vsel %vm62, %v33, 0
    %90 = vmatpush.xpose.msra.mxu0 0.0
    %91 = vmatpush.xpose.msra.mxu0 0.0
    %92 = vmatpush.xpose.msra.mxu0 0.0
    %93 = vmatpush.xpose.msra.mxu0 0.0
    %94 = vmatpush.xpose.msra.mxu0 0.0
    %95 = vmatpush.xpose.msra.mxu0 0.0
    %96 = vmatpush.xpose.msra.mxu0 0.0
    %97 = vmatpush.xpose.msra.mxu0 0.0
    %98 = vmatpush.xpose.msra.mxu0 0.0
    %99 = vmatpush.xpose.msra.mxu0 0.0
    %100 = vmatpush.xpose.msra.mxu0 0.0
    %101 = vmatpush.xpose.msra.mxu0 %v88
    %102 = vmatpush.xpose.msra.mxu0 %v85
    %103 = vmatpush.xpose.msra.mxu0 %v82
    %104 = vmatpush.xpose.msra.mxu0 %v79
    %105 = vmatpush.xpose.msra.mxu0 %v76
    %106 = vmatmul.f32.gmra.mxu0 %v64
    %v107 = vpop.f32.mrf.mxu0
    %v108 = vadd.f32 %v45, %v107
    %109 = vmatmul.f32.gmra.mxu0 %v67
    %v110 = vpop.f32.mrf.mxu0
    %v111 = vadd.f32 %v50, %v110
    %112 = vmatmul.f32.gmra.mxu0 %v70
    %v113 = vpop.f32.mrf.mxu0
    %v114 = vadd.f32 %v55, %v113
    %115 = vmatmul.f32.gmra.mxu0 %v73
    %v116 = vpop.f32.mrf.mxu0
    %v117 = vadd.f32 %v60, %v116
    %118 = vdwg.mxu0
    %v119 = vtanh.pop %v108
    %v120 = vtanh.pop %v111
    %v121 = vtanh.pop %v114
    %v122 = vtanh.pop %v117
    %v123 = vld [vmem:[%s3] sm:$0xff]
    %v124 = vld [vmem:[%s3 + $0x8] sm:$0xff]
    %v125 = vld [vmem:[%s3 + $0x10] sm:$0xff]
    %v126 = vld [vmem:[%s3 + $0x18] sm:$0xff]
    %v127 = vld [vmem:[%s4] sm:$0xff]
    %v128 = vld [vmem:[%s4 + $0x8] sm:$0xff]
    %v129 = vld [vmem:[%s4 + $0x10] sm:$0xff]
    %v130 = vld [vmem:[%s4 + $0x18] sm:$0xff]
    %132 = vset.pattern.permute.xlu0 0
    %133 = vperm.xlu0 %132, %v127
    %v134 = vpop.permute.xlu0 %133
    %137 = vset.pattern.permute.xlu0 0
    %138 = vperm.xlu0 %137, %v128
    %v139 = vpop.permute.xlu0 %138
    %142 = vset.pattern.permute.xlu0 0
    %143 = vperm.xlu0 %142, %v129
    %v144 = vpop.permute.xlu0 %143
    %147 = vset.pattern.permute.xlu0 0
    %148 = vperm.xlu0 %147, %v130
    %v149 = vpop.permute.xlu0 %148
    %vm151 = vcmask 261120
    %v153 = vsel %vm151, %v123, 0
    %v156 = vsel %vm151, %v124, 0
    %v159 = vsel %vm151, %v125, 0
    %v162 = vsel %vm151, %v126, 0
    %164 = vmatpush.msra.mxu0 0.0
    %165 = vmatpush.msra.mxu0 0.0
    %166 = vmatpush.msra.mxu0 0.0
    %167 = vmatpush.msra.mxu0 0.0
    %168 = vmatpush.msra.mxu0 0.0
    %169 = vmatpush.msra.mxu0 0.0
    %170 = vmatpush.msra.mxu0 0.0
    %171 = vmatpush.msra.mxu0 0.0
    %172 = vmatpush.msra.mxu0 0.0
    %173 = vmatpush.msra.mxu0 0.0
    %174 = vmatpush.msra.mxu0 0.0
    %175 = vmatpush.msra.mxu0 0.0
    %176 = vmatpush.msra.mxu0 %v122
    %177 = vmatpush.msra.mxu0 %v121
    %178 = vmatpush.msra.mxu0 %v120
    %179 = vmatpush.msra.mxu0 %v119
    %180 = vmatmul.f32.gmra.mxu0 %v153
    %v181 = vpop.f32.mrf.mxu0
    %v182 = vadd.f32 %v134, %v181
    %183 = vmatmul.f32.gmra.mxu0 %v156
    %v184 = vpop.f32.mrf.mxu0
    %v185 = vadd.f32 %v139, %v184
    %186 = vmatmul.f32.gmra.mxu0 %v159
    %v187 = vpop.f32.mrf.mxu0
    %v188 = vadd.f32 %v144, %v187
    %189 = vmatmul.f32.gmra.mxu0 %v162
    %v190 = vpop.f32.mrf.mxu0
    %v191 = vadd.f32 %v149, %v190
    %192 = vdwg.mxu0
    %v193 = vtanh.pop %v182
    %v194 = vtanh.pop %v185
    %v195 = vtanh.pop %v188
    %v196 = vtanh.pop %v191
    %v197 = vld [vmem:[%s5] sm:$0x1]
    %v198 = vld [vmem:[#allocation2] sm:$0x1]
    %200 = vset.pattern.permute.xlu0 0
    %201 = vperm.xlu0 %200, %v198
    %v202 = vpop.permute.xlu0 %201
    %v204 = vperm.slane %v202, 0
    %v206 = vsel %vm151, %v197, 0
    %208 = vmatpush.msra.mxu0 0.0
    %209 = vmatpush.msra.mxu0 0.0
    %210 = vmatpush.msra.mxu0 0.0
    %211 = vmatpush.msra.mxu0 0.0
    %212 = vmatpush.msra.mxu0 0.0
    %213 = vmatpush.msra.mxu0 0.0
    %214 = vmatpush.msra.mxu0 0.0
    %215 = vmatpush.msra.mxu0 0.0
    %216 = vmatpush.msra.mxu0 0.0
    %217 = vmatpush.msra.mxu0 0.0
    %218 = vmatpush.msra.mxu0 0.0
    %219 = vmatpush.msra.mxu0 0.0
    %220 = vmatpush.msra.mxu0 %v196
    %221 = vmatpush.msra.mxu0 %v195
    %222 = vmatpush.msra.mxu0 %v194
    %223 = vmatpush.msra.mxu0 %v193
    %224 = vmatmul.f32.gmra.mxu0 %v206
    %v225 = vpop.f32.mrf.mxu0
    %v226 = vadd.f32 %v204, %v225
    %227 = vdwg.mxu0
    %vm228 = vcmask 319488
    %229 = vst.msk [vmem:[#allocation3] sm:$0x1] %vm228, %v226
    // Predicated region
    $region30: #{tpu_custom_call.1} parent=1 // pred_check
      _
    $region31: #{tpu_custom_call.1} parent=1 // pred_check_branch
      %231 = sbr.rel (0) target = $region33
    $region32: #{tpu_custom_call.1} parent=1 // pred_region
      %233 = vsyncadd [#allocation4], 0
      %s235 = sshll.u32 [#allocation3], 4
      %s236 = int_to_ptr.vmem [resolvable:$true] %s235
      %s237 = sshll.u32 %s7, 4
      %s238 = int_to_ptr.hbm [resolvable:$true] %s237
      %240 = dma.vmem_to_hbm [thread:$0]  %s236, 16, %s238, [#allocation4]
    $region33: #{tpu_custom_call.1} parent=1 // pred_fallthru
      _
    // Predicated region
    $region34: #{tpu_custom_call.1} parent=1 // pred_check
      _
    $region35: #{tpu_custom_call.1} parent=1 // pred_check_branch
      %242 = sbr.rel (0) target = $region37
    $region36: #{tpu_custom_call.1} parent=1 // pred_region
      %244 = dma.done [#allocation4], 16
    $region37: #{tpu_custom_call.1} parent=1 // pred_fallthru
      _
    %245 = vsyncpa [#allocation4], 1

</llo_original>
